<compile_context>
chip_gen: v6e
topology: v6e:2x2x1
jax: 0.10.0
libtpu: 0.0.40
codegen_flags: <defaults>
</compile_context>

<pallas_src>
import jax
import jax.numpy as jnp
from jax.experimental import pallas as pl
from jax.experimental.pallas import tpu as pltpu


def _neg_loss_kernel(hat_ref, gt_ref, hm_ref, out_ref, acc_ref):
    """Negative (dense) term over one (BLK_R, BLK_C) tile.

    acc_ref : (8, BLK_C) f32 vector accumulator — per-step updates are pure
    VPU adds; the single cross-lane fold happens only on the last column step
    (and the final scalar reduce happens on the tiny output in the wrapper).
    """
    j = pl.program_id(1)

    @pl.when(j == 0)
    def _():
        acc_ref[...] = jnp.zeros_like(acc_ref)

    x = hat_ref[...].astype(jnp.float32)
    g = gt_ref[...].astype(jnp.float32)
    h = hm_ref[...].astype(jnp.float32)

    diff = x - g
    # FusionLoss clamp on (hat - gt).  Keep the torch `>= 1` / `<= -1`
    # semantics (jnp.clip would additionally clamp values in (1-1e-5, 1)).
    f = jnp.where(diff >= 1.0, 1.0 - 1e-5, diff)
    f = jnp.where(f <= -1.0, -1.0 + 1e-5, f)
    # NOTE: focalhogloss's second (1e-4) clamp pair is provably dead after the
    # first clamp, so it is omitted (numerically identical).

    w = 1.0 - h
    neg = jnp.log(1.0 - jnp.abs(f)) * (f * f) * (w * w)

    # Fold the (BLK_R, BLK_C) tile onto (8, BLK_C) with vreg-wise VPU adds.
    blk_r = neg.shape[0]
    part = neg[0:8, :]
    for rg in range(1, blk_r // 8):
        part = part + neg[rg * 8:(rg + 1) * 8, :]
    acc_ref[...] += part

    @pl.when(j == pl.num_programs(1) - 1)
    def _():
        # Fold the (8, BLK_C) accumulator onto a single (8, 128) vreg slab.
        blk_c = acc_ref.shape[1]
        lane = acc_ref[:, 0:128]
        for cg in range(1, blk_c // 128):
            lane = lane + acc_ref[:, cg * 128:(cg + 1) * 128]
        out_ref[...] = lane


def _largest_tile(total, quantum, limit):
    """Largest divisor of `total` that is a multiple of `quantum`, <= limit."""
    limit = max(quantum, min(total, limit))
    best = quantum
    t = quantum
    while t <= limit:
        if total % t == 0:
            best = t
        t += quantum
    return best


def _vmem_limit_bytes():
    """Per-generation scoped-VMEM limit (~75% of physical, capped at 100 MiB)."""
    try:
        cap = int(pltpu.get_tpu_info().vmem_capacity_bytes)
        return min(cap * 3 // 4, 100 * 1024 * 1024)
    except Exception:
        return None  # fall back to the compiler's default scoped limit


def fusion_loss(hat, gt, hm, ind, mask, cat):
    """JAX/Pallas equivalent of FusionLoss.forward(hat, gt, batch)."""
    B, C, H, W = hat.shape
    HW = H * W
    R = B * C
    assert R % 8 == 0, "B*C must be a multiple of 8 sublanes"
    assert HW % 128 == 0, "H*W must be a multiple of 128 lanes"

    vmem_limit = _vmem_limit_bytes()
    budget = vmem_limit if vmem_limit is not None else 16 * 1024 * 1024
    itemsize = jnp.dtype(hat.dtype).itemsize
    # 3 inputs x 2 pipeline buffers must stay well inside the scoped VMEM.
    max_block_elems = max(8 * 128, (budget // 12) // itemsize)
    blk_c = _largest_tile(HW, 128, min(max_block_elems // 8, 32768))
    blk_r = _largest_tile(R, 8, min(max(max_block_elems // blk_c, 8), 512))
    n_row_tiles = R // blk_r

    # Keep the input dtype (bf16 stays bf16) — upcast happens per-tile in-kernel.
    hat2 = hat.reshape(R, HW)
    gt2 = gt.reshape(R, HW)
    hm2 = hm.reshape(R, HW)

    compiler_kwargs = dict(dimension_semantics=("parallel", "arbitrary"))
    if vmem_limit is not None:
        compiler_kwargs["vmem_limit_bytes"] = int(vmem_limit)

    partials = pl.pallas_call(
        _neg_loss_kernel,
        out_shape=jax.ShapeDtypeStruct((n_row_tiles * 8, 128), jnp.float32),
        grid_spec=pltpu.PrefetchScalarGridSpec(
            num_scalar_prefetch=0,
            grid=(n_row_tiles, HW // blk_c),
            in_specs=[
                pl.BlockSpec((blk_r, blk_c), lambda i, j: (i, j)),
                pl.BlockSpec((blk_r, blk_c), lambda i, j: (i, j)),
                pl.BlockSpec((blk_r, blk_c), lambda i, j: (i, j)),
            ],
            out_specs=pl.BlockSpec((8, 128), lambda i, j: (i, 0)),
            scratch_shapes=[pltpu.VMEM((8, blk_c), jnp.float32)],
        ),
        compiler_params=pltpu.CompilerParams(**compiler_kwargs),
    )(hat2, gt2, hm2)
    neg_loss = jnp.sum(partials)

    # ---- positive (peak) term + final combination: tiny B x M work in JAX ----
    # TODO(synk): the M-element data-dependent gather stays in plain JAX
    # (negligible; clamp commutes with gather so we gather raw hat/gt first).
    hat_f = hat.reshape(B, C, HW)
    gt_f = gt.reshape(B, C, HW)
    b_idx = jnp.arange(B)[:, None]
    diff_p = (hat_f[b_idx, cat, ind] - gt_f[b_idx, cat, ind]).astype(jnp.float32)
    p = jnp.where(diff_p >= 1.0, 1.0 - 1e-5, diff_p)
    p = jnp.where(p <= -1.0, -1.0 + 1e-5, p)
    m = mask.astype(jnp.float32)
    pos_loss = jnp.sum(jnp.log(1.0 - jnp.abs(p)) * p * p * m)
    num_pos = jnp.sum(m)

    denom = jnp.where(num_pos == 0.0, 1.0, num_pos)
    return jnp.where(num_pos == 0.0,
                     -neg_loss * 50.0,
                     -(pos_loss + neg_loss) / denom * 50.0)


def fusion_loss_ref(hat, gt, hm, ind, mask, cat):
    """Pure-JAX reference (mirrors the PyTorch forward exactly)."""
    diff = hat - gt
    f = jnp.where(diff >= 1.0, 1.0 - 1e-5, diff)
    f = jnp.where(f <= -1.0, -1.0 + 1e-5, f)
    f = jnp.where(f >= 1.0, 1.0 - 1e-4, f)
    f = jnp.where(f <= -1.0, -1.0 + 1e-4, f)
    gt_w = (1.0 - hm) ** 2
    neg_loss = jnp.sum(jnp.log(1.0 - jnp.abs(f)) * f * f * gt_w)
    B, C, H, W = hat.shape
    f_flat = f.reshape(B, C, H * W)
    b_idx = jnp.arange(B)[:, None]
    pos_pred = f_flat[b_idx, cat, ind]
    m = mask.astype(jnp.float32)
    pos_loss = jnp.sum(jnp.log(1.0 - jnp.abs(pos_pred)) * pos_pred ** 2 * m)
    num_pos = jnp.sum(m)
    denom = jnp.where(num_pos == 0.0, 1.0, num_pos)
    return jnp.where(num_pos == 0.0,
                     -neg_loss * 50.0,
                     -(pos_loss + neg_loss) / denom * 50.0)


if __name__ == "__main__":
    key = jax.random.PRNGKey(0)
    B, C, H, W, M = 2, 8, 16, 16, 8
    k1, k2, k3, k4, k5, k6 = jax.random.split(key, 6)
    hat = jax.random.uniform(k1, (B, C, H, W), dtype=jnp.float32)    # fused heatmap
    gt_hm = jax.random.uniform(k2, (B, C, H, W), dtype=jnp.float32)  # base heatmap
    hm = jax.random.uniform(k3, (B, C, H, W), dtype=jnp.float32)     # batch['hm']
    ind = jax.random.randint(k4, (B, M), 0, H * W)                   # batch['ind']
    cat = jax.random.randint(k5, (B, M), 0, C)                       # batch['cat']
    mask = (jax.random.uniform(k6, (B, M)) > 0.5).astype(jnp.float32)  # batch['mask']

    loss = fusion_loss(hat, gt_hm, hm, ind, mask, cat)
    loss = jax.block_until_ready(loss)

    ref = fusion_loss_ref(hat, gt_hm, hm, ind, mask, cat)
    assert jnp.allclose(loss, ref, rtol=1e-4, atol=1e-4), (float(loss), float(ref))
    print("KERNEL_OK")
</pallas_src>

<mosaic_0001>
module attributes {stable_mosaic.version = 11 : i64} {
  func.func @_neg_loss_kernel(%arg0: i32, %arg1: i32, %arg2: memref<16x256xf32, #tpu.memory_space<vmem>>, %arg3: memref<16x256xf32, #tpu.memory_space<vmem>>, %arg4: memref<16x256xf32, #tpu.memory_space<vmem>>, %arg5: memref<8x128xf32, #tpu.memory_space<vmem>>, %arg6: memref<8x256xf32, #tpu.memory_space<vmem>>) attributes {dimension_semantics = [#tpu.dimension_semantics<parallel>, #tpu.dimension_semantics<arbitrary>], iteration_bounds = array<i64: 1, 1>, scalar_prefetch = 0 : i64, scratch_operands = 1 : i64, tpu.core_type = #tpu.core_type<tc>, window_params = [{transform_indices = @transform_0, window_bounds = array<i64: 16, 256>}, {transform_indices = @transform_1, window_bounds = array<i64: 16, 256>}, {transform_indices = @transform_2, window_bounds = array<i64: 16, 256>}, {transform_indices = @transform_3, window_bounds = array<i64: 8, 128>}]} {
    %c0_i32 = arith.constant 0 : i32
    %0 = arith.cmpi eq, %arg1, %c0_i32 : i32
    %1 = arith.extui %0 : i1 to i32
    %c0_i32_0 = arith.constant 0 : i32
    %2 = arith.cmpi ne, %1, %c0_i32_0 : i32
    scf.if %2 {
      %cst_17 = arith.constant 0.000000e+00 : f32
      %34 = vector.broadcast %cst_17 : f32 to vector<8x256xf32>
      %c0_18 = arith.constant 0 : index
      %c0_19 = arith.constant 0 : index
      %35 = vector.load %arg6[%c0_18, %c0_19] : memref<8x256xf32, #tpu.memory_space<vmem>>, vector<8x256xf32>
      tpu.vector_store %arg6[%c0_18, %c0_19], %34 {strides = array<i32>} : memref<8x256xf32, #tpu.memory_space<vmem>>, vector<8x256xf32>,
    } else {
    }
    %c0 = arith.constant 0 : index
    %c0_1 = arith.constant 0 : index
    %3 = vector.load %arg2[%c0, %c0_1] : memref<16x256xf32, #tpu.memory_space<vmem>>, vector<16x256xf32>
    %c0_2 = arith.constant 0 : index
    %c0_3 = arith.constant 0 : index
    %4 = vector.load %arg3[%c0_2, %c0_3] : memref<16x256xf32, #tpu.memory_space<vmem>>, vector<16x256xf32>
    %c0_4 = arith.constant 0 : index
    %c0_5 = arith.constant 0 : index
    %5 = vector.load %arg4[%c0_4, %c0_5] : memref<16x256xf32, #tpu.memory_space<vmem>>, vector<16x256xf32>
    %6 = arith.subf %3, %4 : vector<16x256xf32>
    %cst = arith.constant 1.000000e+00 : f32
    %7 = vector.broadcast %cst : f32 to vector<16x256xf32>
    %8 = arith.cmpf oge, %6, %7 : vector<16x256xf32>
    %cst_6 = arith.constant 0.999989986 : f32
    %9 = vector.broadcast %cst_6 : f32 to vector<16x256xf32>
    %10 = arith.select %8, %9, %6 : vector<16x256xi1>, vector<16x256xf32>
    %cst_7 = arith.constant -1.000000e+00 : f32
    %11 = vector.broadcast %cst_7 : f32 to vector<16x256xf32>
    %12 = arith.cmpf ole, %10, %11 : vector<16x256xf32>
    %cst_8 = arith.constant -0.999989986 : f32
    %13 = vector.broadcast %cst_8 : f32 to vector<16x256xf32>
    %14 = arith.select %12, %13, %10 : vector<16x256xi1>, vector<16x256xf32>
    %cst_9 = arith.constant 1.000000e+00 : f32
    %15 = vector.broadcast %cst_9 : f32 to vector<16x256xf32>
    %16 = arith.subf %15, %5 : vector<16x256xf32>
    %17 = math.absf %14 : vector<16x256xf32>
    %cst_10 = arith.constant 1.000000e+00 : f32
    %18 = vector.broadcast %cst_10 : f32 to vector<16x256xf32>
    %19 = arith.subf %18, %17 : vector<16x256xf32>
    %20 = math.log %19 : vector<16x256xf32>
    %21 = arith.mulf %14, %14 : vector<16x256xf32>
    %22 = arith.mulf %20, %21 : vector<16x256xf32>
    %23 = arith.mulf %16, %16 : vector<16x256xf32>
    %24 = arith.mulf %22, %23 : vector<16x256xf32>
    %25 = vector.extract_strided_slice %24 {offsets = [0, 0], sizes = [8, 256], strides = [1, 1]} : vector<16x256xf32> to vector<8x256xf32>
    %26 = vector.extract_strided_slice %24 {offsets = [8, 0], sizes = [8, 256], strides = [1, 1]} : vector<16x256xf32> to vector<8x256xf32>
    %27 = arith.addf %25, %26 : vector<8x256xf32>
    %c0_11 = arith.constant 0 : index
    %c0_12 = arith.constant 0 : index
    %28 = vector.load %arg6[%c0_11, %c0_12] : memref<8x256xf32, #tpu.memory_space<vmem>>, vector<8x256xf32>
    %29 = arith.addf %28, %27 : vector<8x256xf32>
    %c0_13 = arith.constant 0 : index
    %c0_14 = arith.constant 0 : index
    %30 = vector.load %arg6[%c0_13, %c0_14] : memref<8x256xf32, #tpu.memory_space<vmem>>, vector<8x256xf32>
    tpu.vector_store %arg6[%c0_13, %c0_14], %29 {strides = array<i32>} : memref<8x256xf32, #tpu.memory_space<vmem>>, vector<8x256xf32>,
    %c0_i32_15 = arith.constant 0 : i32
    %31 = arith.cmpi eq, %arg1, %c0_i32_15 : i32
    %32 = arith.extui %31 : i1 to i32
    %c0_i32_16 = arith.constant 0 : i32
    %33 = arith.cmpi ne, %32, %c0_i32_16 : i32
    scf.if %33 {
      %c0_17 = arith.constant 0 : index
      %c0_18 = arith.constant 0 : index
      %34 = vector.load %arg6[%c0_17, %c0_18] : memref<8x256xf32, #tpu.memory_space<vmem>>, vector<8x128xf32>
      %c0_19 = arith.constant 0 : index
      %c128 = arith.constant 128 : index
      %35 = vector.load %arg6[%c0_19, %c128] : memref<8x256xf32, #tpu.memory_space<vmem>>, vector<8x128xf32>
      %36 = arith.addf %34, %35 : vector<8x128xf32>
      %c0_20 = arith.constant 0 : index
      %c0_21 = arith.constant 0 : index
      %37 = vector.load %arg5[%c0_20, %c0_21] : memref<8x128xf32, #tpu.memory_space<vmem>>, vector<8x128xf32>
      tpu.vector_store %arg5[%c0_20, %c0_21], %36 {strides = array<i32>} : memref<8x128xf32, #tpu.memory_space<vmem>>, vector<8x128xf32>,
    } else {
    }
    return
  }
  func.func @transform_0(%arg0: i32, %arg1: i32) -> (i32, i32) {
    %c0_i32 = arith.constant 0 : i32
    return %arg0, %arg1 : i32, i32
  }
  func.func @transform_1(%arg0: i32, %arg1: i32) -> (i32, i32) {
    %c0_i32 = arith.constant 0 : i32
    return %arg0, %arg1 : i32, i32
  }
  func.func @transform_2(%arg0: i32, %arg1: i32) -> (i32, i32) {
    %c0_i32 = arith.constant 0 : i32
    return %arg0, %arg1 : i32, i32
  }
  func.func @transform_3(%arg0: i32, %arg1: i32) -> (i32, i32) {
    %c0_i32 = arith.constant 0 : i32
    %c0_i32_0 = arith.constant 0 : i32
    return %arg0, %c0_i32 : i32, i32
  }
}

</mosaic_0001>

<llo_original>
// kernel: tpu_custom_call.1
$region0: #{tpu_custom_call.1}
  #allocation0 [shape = 'u32[]', space=smem, size = 0x4, offset = 0x4, fixed_abs, tag = 'smem constant byte address 0x4 - core index']
  #allocation1 [shape = 'u32[144,128]{1,0:T(1,128)}', space=vmem, size = 0x12000, scoped, tag = 'internal scratch']
  #allocation2 [shape = 'f32[8,256]{1,0:T(8,128)}', space=vmem, size = 0x2000, scoped, tag = 'scratch operand']
  %s0 = inlined_call_operand.hbm [shape: f32[16,256], index: 0, kind: input, shape index: {}]
  %s1 = inlined_call_operand.hbm [shape: f32[16,256], index: 1, kind: input, shape index: {}]
  %s2 = inlined_call_operand.hbm [shape: f32[16,256], index: 2, kind: input, shape index: {}]
  %s3 = inlined_call_operand.hbm [shape: f32[8,128], index: 3, kind: output, shape index: {}]
  %s4 = sld [smem:[#allocation0]]
  $region42: #{tpu_custom_call.1} parent=0
    _
  %s6 = ssub.s32 1, %s4
  %s7 = scalar_select 0, %s6, %s4
  $region1: #{tpu_custom_call.1} parent=0
    #allocation3 [shape = 'u8[16384]{0}', space=vmem, size = 0x4000, scoped, tag = 'input window, operand 0, single buffered']
    #allocation4 [shape = 's32[1]{0}', space=sflag, size = 0x4, scoped, tag = 'scoped memory for tpu_custom_call.1']
    #allocation5 [shape = 's32[1]{0}', space=sflag, size = 0x4, scoped, tag = 'scoped memory for tpu_custom_call.1']
    #allocation6 [shape = 'u8[16384]{0}', space=vmem, size = 0x4000, scoped, tag = 'input window, operand 1, single buffered']
    #allocation7 [shape = 's32[1]{0}', space=sflag, size = 0x4, scoped, tag = 'scoped memory for tpu_custom_call.1']
    #allocation8 [shape = 'u8[16384]{0}', space=vmem, size = 0x4000, scoped, tag = 'input window, operand 2, single buffered']
    #allocation9 [shape = 'u8[4096]{0}', space=vmem, size = 0x1000, scoped, tag = 'output window, operand 0, single buffered']
    %8 = vsyncpa [#allocation4], 0
    %9 = vsyncpa [#allocation7], 0
    %10 = vsyncpa [#allocation5], 0
    // Predicated region
    $region2: #{tpu_custom_call.1} parent=1 // pred_check
      _
    $region3: #{tpu_custom_call.1} parent=1 // pred_check_branch
      %12 = sbr.rel (0) target = $region5
    $region4: #{tpu_custom_call.1} parent=1 // pred_region
      %s14 = ssub.s32 512, 512
      %15 = vsyncadd [#allocation4], %s14
      %s16 = sshll.u32 [#allocation3], 4
      %s17 = int_to_ptr.vmem [resolvable:$true] %s16
      %22 = dma.hbm_to_vmem [thread:$0]  %s0, 512, %s17, [#allocation4], 256, 256, 16
    $region5: #{tpu_custom_call.1} parent=1 // pred_fallthru
      _
    // Predicated region
    $region6: #{tpu_custom_call.1} parent=1 // pred_check
      _
    $region7: #{tpu_custom_call.1} parent=1 // pred_check_branch
      %24 = sbr.rel (0) target = $region9
    $region8: #{tpu_custom_call.1} parent=1 // pred_region
      %s26 = ssub.s32 512, 512
      %27 = vsyncadd [#allocation7], %s26
      %s28 = sshll.u32 [#allocation6], 4
      %s29 = int_to_ptr.vmem [resolvable:$true] %s28
      %34 = dma.hbm_to_vmem [thread:$0]  %s1, 512, %s29, [#allocation7], 256, 256, 16
    $region9: #{tpu_custom_call.1} parent=1 // pred_fallthru
      _
    // Predicated region
    $region10: #{tpu_custom_call.1} parent=1 // pred_check
      _
    $region11: #{tpu_custom_call.1} parent=1 // pred_check_branch
      %36 = sbr.rel (0) target = $region13
    $region12: #{tpu_custom_call.1} parent=1 // pred_region
      %s38 = ssub.s32 512, 512
      %39 = vsyncadd [#allocation7], %s38
      %s40 = sshll.u32 [#allocation8], 4
      %s41 = int_to_ptr.vmem [resolvable:$true] %s40
      %46 = dma.hbm_to_vmem [thread:$0]  %s2, 512, %s41, [#allocation7], 256, 256, 16
    $region13: #{tpu_custom_call.1} parent=1 // pred_fallthru
      _
    // Predicated region
    $region14: #{tpu_custom_call.1} parent=1 // pred_check
      _
    $region15: #{tpu_custom_call.1} parent=1 // pred_check_branch
      %48 = sbr.rel (0) target = $region17
    $region16: #{tpu_custom_call.1} parent=1 // pred_region
      %49 = dma.done [#allocation4], 512
    $region17: #{tpu_custom_call.1} parent=1 // pred_fallthru
      _
    // Predicated region
    $region18: #{tpu_custom_call.1} parent=1 // pred_check
      _
    $region19: #{tpu_custom_call.1} parent=1 // pred_check_branch
      %51 = sbr.rel (0) target = $region21
    $region20: #{tpu_custom_call.1} parent=1 // pred_region
      %52 = dma.done [#allocation7], 512
    $region21: #{tpu_custom_call.1} parent=1 // pred_fallthru
      _
    // Predicated region
    $region22: #{tpu_custom_call.1} parent=1 // pred_check
      _
    $region23: #{tpu_custom_call.1} parent=1 // pred_check_branch
      %54 = sbr.rel (0) target = $region25
    $region24: #{tpu_custom_call.1} parent=1 // pred_region
      %55 = dma.done [#allocation7], 512
    $region25: #{tpu_custom_call.1} parent=1 // pred_fallthru
      _
    %p56 = scmp.eq.s32.totalorder 0, 0
    // Predicated region
    $region26: #{tpu_custom_call.1} parent=1 // pred_check
      %p57 = pneg %p56
    $region27: #{tpu_custom_call.1} parent=1 // pred_check_branch
      %59 = sbr.rel (%p57) target = $region29
    $region28: #{tpu_custom_call.1} parent=1 // pred_region
      %60 = vst [vmem:[#allocation2] sm:$0xff] 0.0
      %61 = vst [vmem:[#allocation2 + $0x8] sm:$0xff] 0.0
    $region29: #{tpu_custom_call.1} parent=1 // pred_fallthru
      _
    %v62 = vld [vmem:[#allocation3] sm:$0xff]
    %v63 = vld [vmem:[#allocation3 + $0x8] sm:$0xff]
    %v64 = vld [vmem:[#allocation3 + $0x10] sm:$0xff]
    %v65 = vld [vmem:[#allocation3 + $0x18] sm:$0xff]
    %v66 = vld [vmem:[#allocation6] sm:$0xff]
    %v67 = vld [vmem:[#allocation6 + $0x8] sm:$0xff]
    %v68 = vld [vmem:[#allocation6 + $0x10] sm:$0xff]
    %v69 = vld [vmem:[#allocation6 + $0x18] sm:$0xff]
    %v70 = vld [vmem:[#allocation8] sm:$0xff]
    %v71 = vld [vmem:[#allocation8 + $0x8] sm:$0xff]
    %v72 = vld [vmem:[#allocation8 + $0x10] sm:$0xff]
    %v73 = vld [vmem:[#allocation8 + $0x18] sm:$0xff]
    %v74 = vsub.f32 %v62, %v66
    %v75 = vsub.f32 %v63, %v67
    %v76 = vsub.f32 %v64, %v68
    %v77 = vsub.f32 %v65, %v69
    %vm78 = vcmp.ge.f32.partialorder %v74, 1.0
    %vm79 = vcmp.ge.f32.partialorder %v75, 1.0
    %vm80 = vcmp.ge.f32.partialorder %v76, 1.0
    %vm81 = vcmp.ge.f32.partialorder %v77, 1.0
    %v82 = vsel %vm78, 0.99999, %v74
    %v83 = vsel %vm79, 0.99999, %v75
    %v84 = vsel %vm80, 0.99999, %v76
    %v85 = vsel %vm81, 0.99999, %v77
    %vm86 = vcmp.le.f32.partialorder %v82, -1.0
    %vm87 = vcmp.le.f32.partialorder %v83, -1.0
    %vm88 = vcmp.le.f32.partialorder %v84, -1.0
    %vm89 = vcmp.le.f32.partialorder %v85, -1.0
    %v90 = vsel %vm86, -0.99999, %v82
    %v91 = vsel %vm87, -0.99999, %v83
    %v92 = vsel %vm88, -0.99999, %v84
    %v93 = vsel %vm89, -0.99999, %v85
    %v94 = vsub.f32 1.0, %v70
    %v95 = vsub.f32 1.0, %v71
    %v96 = vsub.f32 1.0, %v72
    %v97 = vsub.f32 1.0, %v73
    %v98 = vand.u32 2147483647, %v90
    %v99 = vand.u32 2147483647, %v91
    %v100 = vand.u32 2147483647, %v92
    %v101 = vand.u32 2147483647, %v93
    %v102 = vsub.f32 1.0, %v98
    %v103 = vsub.f32 1.0, %v99
    %v104 = vsub.f32 1.0, %v100
    %v105 = vsub.f32 1.0, %v101
    %v106 = vlog2.pop %v102
    %v107 = vmul.f32 %v106, 0.6931472
    %v108 = vlog2.pop %v103
    %v109 = vmul.f32 %v108, 0.6931472
    %v110 = vlog2.pop %v104
    %v111 = vmul.f32 %v110, 0.6931472
    %v112 = vlog2.pop %v105
    %v113 = vmul.f32 %v112, 0.6931472
    %v114 = vmul.f32 %v90, %v90
    %v115 = vmul.f32 %v91, %v91
    %v116 = vmul.f32 %v92, %v92
    %v117 = vmul.f32 %v93, %v93
    %v118 = vmul.f32 %v107, %v114
    %v119 = vmul.f32 %v109, %v115
    %v120 = vmul.f32 %v111, %v116
    %v121 = vmul.f32 %v113, %v117
    %v122 = vmul.f32 %v94, %v94
    %v123 = vmul.f32 %v95, %v95
    %v124 = vmul.f32 %v96, %v96
    %v125 = vmul.f32 %v97, %v97
    %v126 = vmul.f32 %v118, %v122
    %v127 = vmul.f32 %v119, %v123
    %v128 = vmul.f32 %v120, %v124
    %v129 = vmul.f32 %v121, %v125
    %v130 = vadd.f32 %v126, %v128
    %v131 = vadd.f32 %v127, %v129
    %v132 = vld [vmem:[#allocation2] sm:$0xff]
    %v133 = vld [vmem:[#allocation2 + $0x8] sm:$0xff]
    %v134 = vadd.f32 %v132, %v130
    %v135 = vadd.f32 %v133, %v131
    %136 = vst [vmem:[#allocation2] sm:$0xff] %v134
    %137 = vst [vmem:[#allocation2 + $0x8] sm:$0xff] %v135
    // Predicated region
    $region30: #{tpu_custom_call.1} parent=1 // pred_check
      %p138 = pneg %p56
    $region31: #{tpu_custom_call.1} parent=1 // pred_check_branch
      %140 = sbr.rel (%p138) target = $region33
    $region32: #{tpu_custom_call.1} parent=1 // pred_region
      %v141 = vld [vmem:[#allocation2] sm:$0xff]
      %v142 = vld [vmem:[#allocation2 + $0x8] sm:$0xff]
      %v143 = vadd.f32 %v141, %v142
      %144 = vst [vmem:[#allocation9] sm:$0xff] %v143
    $region33: #{tpu_custom_call.1} parent=1 // pred_fallthru
      _
    // Predicated region
    $region34: #{tpu_custom_call.1} parent=1 // pred_check
      _
    $region35: #{tpu_custom_call.1} parent=1 // pred_check_branch
      %146 = sbr.rel (0) target = $region37
    $region36: #{tpu_custom_call.1} parent=1 // pred_region
      %s148 = ssub.s32 128, 128
      %149 = vsyncadd [#allocation5], %s148
      %s151 = sshll.u32 [#allocation9], 4
      %s152 = int_to_ptr.vmem [resolvable:$true] %s151
      %154 = dma.vmem_to_hbm [thread:$0]  %s152, 128, %s3, [#allocation5]
    $region37: #{tpu_custom_call.1} parent=1 // pred_fallthru
      _
    // Predicated region
    $region38: #{tpu_custom_call.1} parent=1 // pred_check
      _
    $region39: #{tpu_custom_call.1} parent=1 // pred_check_branch
      %156 = sbr.rel (0) target = $region41
    $region40: #{tpu_custom_call.1} parent=1 // pred_region
      %157 = dma.done [#allocation5], 128
    $region41: #{tpu_custom_call.1} parent=1 // pred_fallthru
      _
    %158 = vsyncpa [#allocation4], 1
    %159 = vsyncpa [#allocation7], 1
    %160 = vsyncpa [#allocation5], 1

</llo_original>
